<compile_context>
chip_gen: v6e
topology: v6e:2x2x1
jax: 0.10.0
libtpu: 0.0.40
codegen_flags: <defaults>
</compile_context>

<pallas_src>
import functools

import jax
import jax.numpy as jnp
from jax.experimental import pallas as pl
from jax.experimental.pallas import tpu as pltpu

TEMPERATURE = 0.07
EPS = 1e-12  # matches torch.nn.functional.normalize default eps


def _infonce_kernel(a_ref, p_ref, n_ref, out_ref, *, batch, tile_rows,
                    tiles_per_core, inv_temp):
    c = pl.program_id(0)          # core / parallel axis
    t = pl.program_id(1)          # batch-tile axis (sequential, accumulating)
    global_tile = c * tiles_per_core + t

    @pl.when(t == 0)
    def _():
        out_ref[...] = jnp.zeros_like(out_ref)

    a = a_ref[...].astype(jnp.float32)
    p = p_ref[...].astype(jnp.float32)
    n = n_ref[...].astype(jnp.float32)

    # F.normalize(x)·F.normalize(y) == (x·y) * rsqrt(max(|x|^2,eps^2) *
    # max(|y|^2,eps^2)) — per-row scalar factors commute with the dot, so we
    # never materialize normalized full tiles.
    eps2 = EPS * EPS
    ssa = jnp.maximum(jnp.sum(a * a, axis=1, keepdims=True), eps2)  # [TB,1]
    ssp = jnp.maximum(jnp.sum(p * p, axis=1, keepdims=True), eps2)
    ssn = jnp.maximum(jnp.sum(n * n, axis=1, keepdims=True), eps2)
    ap = jnp.sum(a * p, axis=1, keepdims=True)
    an = jnp.sum(a * n, axis=1, keepdims=True)

    pos = ap * jax.lax.rsqrt(ssa * ssp)
    neg = an * jax.lax.rsqrt(ssa * ssn)

    # cross_entropy over [pos, neg] with label 0
    #   == logsumexp([pos, neg]/T) - pos/T == softplus((neg - pos)/T), stable.
    d = (neg - pos) * inv_temp
    per_example = jnp.maximum(d, 0.0) + jnp.log1p(jnp.exp(-jnp.abs(d)))

    # Masking only on tiles that extend past B (ragged last tile, or the
    # clamped overflow tiles created by the 2-way core split).
    full = (global_tile + 1) * tile_rows <= batch

    @pl.when(full)
    def _():
        out_ref[...] += jnp.sum(per_example)

    @pl.when(jnp.logical_not(full))
    def _():
        row = global_tile * tile_rows + jax.lax.broadcasted_iota(
            jnp.int32, (tile_rows, 1), 0)
        masked = jnp.where(row < batch, per_example, 0.0)
        out_ref[...] += jnp.sum(masked)


def _round_up(x, m):
    return ((x + m - 1) // m) * m


def _choose_tile_rows(B, D, itemsize):
    # Budget on the *physical* on-chip footprint: lanes padded to 128,
    # sublanes padded to the dtype's pack.  3 inputs x 2 pipeline buffers
    # must stay under ~24 MiB (fits v7x's 64 MiB VMEM with headroom, and
    # v5e/v6e with the raised scoped limit).
    pack = {4: 8, 2: 16, 1: 32}.get(itemsize, 8)
    d_padded = _round_up(max(D, 1), 128)
    budget_bytes = 24 * 1024 * 1024
    tb = budget_bytes // (3 * 2 * d_padded * itemsize)
    tb = max(pack, (tb // pack) * pack)
    if B <= tb:
        return B  # single tile; block dim == full array dim is always legal
    return tb


def infonce_loss(anchor, positive, negative, temperature=TEMPERATURE,
                 tile_rows=None):
    """InfoNCE loss; inputs may be f32 or bf16 (math is done in f32)."""
    B, D = anchor.shape
    itemsize = jnp.dtype(anchor.dtype).itemsize
    tb = tile_rows if tile_rows is not None else _choose_tile_rows(B, D, itemsize)
    num_tiles = pl.cdiv(B, tb)
    num_cores = 2 if num_tiles >= 2 else 1        # v7x megacore split
    tiles_per_core = pl.cdiv(num_tiles, num_cores)

    kernel = functools.partial(
        _infonce_kernel, batch=B, tile_rows=tb,
        tiles_per_core=tiles_per_core, inv_temp=1.0 / temperature)

    def in_map(c, t):
        # Clamp so overflow tiles (odd num_tiles split across 2 cores) stay in
        # bounds; their rows are fully masked out inside the kernel.
        return (jnp.minimum(c * tiles_per_core + t, num_tiles - 1), 0)

    in_spec = pl.BlockSpec((tb, D), in_map)

    partials = pl.pallas_call(
        kernel,
        out_shape=jax.ShapeDtypeStruct((num_cores * 8, 128), jnp.float32),
        grid=(num_cores, tiles_per_core),
        in_specs=[in_spec, in_spec, in_spec],
        out_specs=pl.BlockSpec((8, 128), lambda c, t: (c, 0)),
        compiler_params=pltpu.CompilerParams(
            # Tile axis carries the accumulating output block -> sequential;
            # core axis is independent -> parallel (both TCs on v7x).
            dimension_semantics=("parallel", "arbitrary"),
            # Raise the default scoped VMEM limit (16 MiB on v5e, 32 MiB on
            # v6e/v7x) so the ~24 MiB padded double-buffered set pipelines.
            vmem_limit_bytes=48 * 1024 * 1024,
        ),
    )(anchor, positive, negative)

    per_core = partials[0::8, 0]                   # one scalar per core block
    return jnp.sum(per_core) * (1.0 / B)


def _infonce_ref(anchor, positive, negative, temperature=TEMPERATURE):
    # Plain-JAX reference (mirrors the PyTorch module) for a sanity check.
    def l2norm(x):
        nrm = jnp.sqrt(jnp.sum(x * x, axis=1, keepdims=True))
        return x / jnp.maximum(nrm, EPS)

    a, p, n = l2norm(anchor), l2norm(positive), l2norm(negative)
    pos = jnp.sum(a * p, axis=1) / temperature
    neg = jnp.sum(a * n, axis=1) / temperature
    logits = jnp.stack([pos, neg], axis=1)
    logz = jax.scipy.special.logsumexp(logits, axis=1)
    return jnp.mean(logz - logits[:, 0])


if __name__ == "__main__":
    key = jax.random.PRNGKey(0)

    # Case 1: module-sized shapes, single tile, single core.
    k1, k2, k3 = jax.random.split(key, 3)
    B, D = 8, 32
    anchor = jax.random.normal(k1, (B, D), dtype=jnp.float32)
    positive = jax.random.normal(k2, (B, D), dtype=jnp.float32)
    negative = jax.random.normal(k3, (B, D), dtype=jnp.float32)

    loss = infonce_loss(anchor, positive, negative)
    jax.block_until_ready(loss)
    ref = _infonce_ref(anchor, positive, negative)
    assert jnp.allclose(loss, ref, atol=1e-5, rtol=1e-4), (loss, ref)

    # Case 2: ragged batch + 2-way core split (tile_rows forced small so the
    # multi-tile / masking / overflow-tile paths are exercised).
    k4, k5, k6 = jax.random.split(jax.random.PRNGKey(1), 3)
    B2, D2 = 37, 32
    a2 = jax.random.normal(k4, (B2, D2), dtype=jnp.float32)
    p2 = jax.random.normal(k5, (B2, D2), dtype=jnp.float32)
    n2 = jax.random.normal(k6, (B2, D2), dtype=jnp.float32)

    loss2 = infonce_loss(a2, p2, n2, tile_rows=16)
    jax.block_until_ready(loss2)
    ref2 = _infonce_ref(a2, p2, n2)
    assert jnp.allclose(loss2, ref2, atol=1e-5, rtol=1e-4), (loss2, ref2)

    print("KERNEL_OK")
</pallas_src>

<mosaic_0001>
module attributes {stable_mosaic.version = 11 : i64} {
  func.func @_infonce_kernel(%arg0: i32, %arg1: i32, %arg2: memref<8x32xf32, #tpu.memory_space<vmem>>, %arg3: memref<8x32xf32, #tpu.memory_space<vmem>>, %arg4: memref<8x32xf32, #tpu.memory_space<vmem>>, %arg5: memref<8x128xf32, #tpu.memory_space<vmem>>) attributes {dimension_semantics = [#tpu.dimension_semantics<parallel>, #tpu.dimension_semantics<arbitrary>], iteration_bounds = array<i64: 1, 1>, scalar_prefetch = 0 : i64, scratch_operands = 0 : i64, tpu.core_type = #tpu.core_type<tc>, window_params = [{transform_indices = @transform_0, window_bounds = array<i64: 8, 32>}, {transform_indices = @transform_1, window_bounds = array<i64: 8, 32>}, {transform_indices = @transform_2, window_bounds = array<i64: 8, 32>}, {transform_indices = @transform_3, window_bounds = array<i64: 8, 128>}]} {
    %c1_i32 = arith.constant 1 : i32
    %0 = arith.muli %arg0, %c1_i32 : i32
    %1 = arith.addi %0, %arg1 : i32
    %c0_i32 = arith.constant 0 : i32
    %2 = arith.cmpi eq, %arg1, %c0_i32 : i32
    %3 = arith.extui %2 : i1 to i32
    %c0_i32_0 = arith.constant 0 : i32
    %4 = arith.cmpi ne, %3, %c0_i32_0 : i32
    scf.if %4 {
      %cst_20 = arith.constant 0.000000e+00 : f32
      %54 = vector.broadcast %cst_20 : f32 to vector<8x128xf32>
      %c0_21 = arith.constant 0 : index
      %c0_22 = arith.constant 0 : index
      %55 = vector.load %arg5[%c0_21, %c0_22] : memref<8x128xf32, #tpu.memory_space<vmem>>, vector<8x128xf32>
      tpu.vector_store %arg5[%c0_21, %c0_22], %54 {strides = array<i32>} : memref<8x128xf32, #tpu.memory_space<vmem>>, vector<8x128xf32>,
    } else {
    }
    %c0 = arith.constant 0 : index
    %c0_1 = arith.constant 0 : index
    %5 = vector.load %arg2[%c0, %c0_1] : memref<8x32xf32, #tpu.memory_space<vmem>>, vector<8x32xf32>
    %c0_2 = arith.constant 0 : index
    %c0_3 = arith.constant 0 : index
    %6 = vector.load %arg3[%c0_2, %c0_3] : memref<8x32xf32, #tpu.memory_space<vmem>>, vector<8x32xf32>
    %c0_4 = arith.constant 0 : index
    %c0_5 = arith.constant 0 : index
    %7 = vector.load %arg4[%c0_4, %c0_5] : memref<8x32xf32, #tpu.memory_space<vmem>>, vector<8x32xf32>
    %8 = arith.mulf %5, %5 : vector<8x32xf32>
    %cst = arith.constant dense<0.000000e+00> : vector<8xf32>
    %9 = vector.multi_reduction <add>, %8, %cst [1] : vector<8x32xf32> to vector<8xf32>
    %10 = vector.shape_cast %9 : vector<8xf32> to vector<8x1xf32>
    %cst_6 = arith.constant 1.000000e-24 : f32
    %11 = vector.broadcast %cst_6 : f32 to vector<8x1xf32>
    %12 = arith.maximumf %10, %11 : vector<8x1xf32>
    %13 = arith.mulf %6, %6 : vector<8x32xf32>
    %cst_7 = arith.constant dense<0.000000e+00> : vector<8xf32>
    %14 = vector.multi_reduction <add>, %13, %cst_7 [1] : vector<8x32xf32> to vector<8xf32>
    %15 = vector.shape_cast %14 : vector<8xf32> to vector<8x1xf32>
    %cst_8 = arith.constant 1.000000e-24 : f32
    %16 = vector.broadcast %cst_8 : f32 to vector<8x1xf32>
    %17 = arith.maximumf %15, %16 : vector<8x1xf32>
    %18 = arith.mulf %7, %7 : vector<8x32xf32>
    %cst_9 = arith.constant dense<0.000000e+00> : vector<8xf32>
    %19 = vector.multi_reduction <add>, %18, %cst_9 [1] : vector<8x32xf32> to vector<8xf32>
    %20 = vector.shape_cast %19 : vector<8xf32> to vector<8x1xf32>
    %cst_10 = arith.constant 1.000000e-24 : f32
    %21 = vector.broadcast %cst_10 : f32 to vector<8x1xf32>
    %22 = arith.maximumf %20, %21 : vector<8x1xf32>
    %23 = arith.mulf %5, %6 : vector<8x32xf32>
    %cst_11 = arith.constant dense<0.000000e+00> : vector<8xf32>
    %24 = vector.multi_reduction <add>, %23, %cst_11 [1] : vector<8x32xf32> to vector<8xf32>
    %25 = vector.shape_cast %24 : vector<8xf32> to vector<8x1xf32>
    %26 = arith.mulf %5, %7 : vector<8x32xf32>
    %cst_12 = arith.constant dense<0.000000e+00> : vector<8xf32>
    %27 = vector.multi_reduction <add>, %26, %cst_12 [1] : vector<8x32xf32> to vector<8xf32>
    %28 = vector.shape_cast %27 : vector<8xf32> to vector<8x1xf32>
    %29 = arith.mulf %12, %17 : vector<8x1xf32>
    %30 = math.rsqrt %29 : vector<8x1xf32>
    %31 = arith.mulf %25, %30 : vector<8x1xf32>
    %32 = arith.mulf %12, %22 : vector<8x1xf32>
    %33 = math.rsqrt %32 : vector<8x1xf32>
    %34 = arith.mulf %28, %33 : vector<8x1xf32>
    %35 = arith.subf %34, %31 : vector<8x1xf32>
    %cst_13 = arith.constant 14.2857141 : f32
    %36 = vector.broadcast %cst_13 : f32 to vector<8x1xf32>
    %37 = arith.mulf %35, %36 : vector<8x1xf32>
    %cst_14 = arith.constant 0.000000e+00 : f32
    %38 = vector.broadcast %cst_14 : f32 to vector<8x1xf32>
    %39 = arith.maximumf %37, %38 : vector<8x1xf32>
    %40 = math.absf %37 : vector<8x1xf32>
    %cst_15 = arith.constant 0.000000e+00 : f32
    %41 = vector.broadcast %cst_15 : f32 to vector<8x1xf32>
    %42 = arith.subf %41, %40 : vector<8x1xf32>
    %43 = math.exp %42 : vector<8x1xf32>
    %44 = math.log1p %43 : vector<8x1xf32>
    %45 = arith.addf %39, %44 : vector<8x1xf32>
    %c1_i32_16 = arith.constant 1 : i32
    %46 = arith.addi %1, %c1_i32_16 : i32
    %c8_i32 = arith.constant 8 : i32
    %47 = arith.muli %46, %c8_i32 : i32
    %c8_i32_17 = arith.constant 8 : i32
    %48 = arith.cmpi sle, %47, %c8_i32_17 : i32
    %49 = arith.extui %48 : i1 to i32
    %c0_i32_18 = arith.constant 0 : i32
    %50 = arith.cmpi ne, %49, %c0_i32_18 : i32
    scf.if %50 {
      %c0_20 = arith.constant 0 : index
      %c0_21 = arith.constant 0 : index
      %54 = vector.load %arg5[%c0_20, %c0_21] : memref<8x128xf32, #tpu.memory_space<vmem>>, vector<8x128xf32>
      %55 = vector.shape_cast %45 : vector<8x1xf32> to vector<1x8x1xf32>
      %cst_22 = arith.constant dense<0.000000e+00> : vector<1xf32>
      %56 = vector.multi_reduction <add>, %55, %cst_22 [1, 2] : vector<1x8x1xf32> to vector<1xf32>
      %57 = vector.shape_cast %56 : vector<1xf32> to vector<1x1x1xf32>
      %58 = vector.extract %57[0, 0, 0] : f32 from vector<1x1x1xf32>
      %59 = vector.broadcast %58 : f32 to vector<8x128xf32>
      %60 = arith.addf %54, %59 : vector<8x128xf32>
      %c0_23 = arith.constant 0 : index
      %c0_24 = arith.constant 0 : index
      %61 = vector.load %arg5[%c0_23, %c0_24] : memref<8x128xf32, #tpu.memory_space<vmem>>, vector<8x128xf32>
      tpu.vector_store %arg5[%c0_23, %c0_24], %60 {strides = array<i32>} : memref<8x128xf32, #tpu.memory_space<vmem>>, vector<8x128xf32>,
    } else {
    }
    %true = arith.constant true
    %51 = arith.xori %48, %true : i1
    %52 = arith.extui %51 : i1 to i32
    %c0_i32_19 = arith.constant 0 : i32
    %53 = arith.cmpi ne, %52, %c0_i32_19 : i32
    scf.if %53 {
      %c8_i32_20 = arith.constant 8 : i32
      %54 = arith.muli %1, %c8_i32_20 : i32
      %55 = tpu.iota {dimensions = array<i32: 0>} : vector<8x1xi32>
      %56 = vector.broadcast %54 : i32 to vector<8x1xi32>
      %57 = arith.addi %56, %55 : vector<8x1xi32>
      %c8_i32_21 = arith.constant 8 : i32
      %58 = vector.broadcast %c8_i32_21 : i32 to vector<8x1xi32>
      %59 = arith.cmpi slt, %57, %58 : vector<8x1xi32>
      %cst_22 = arith.constant 0.000000e+00 : f32
      %60 = vector.broadcast %cst_22 : f32 to vector<8x1xf32>
      %61 = arith.select %59, %45, %60 : vector<8x1xi1>, vector<8x1xf32>
      %c0_23 = arith.constant 0 : index
      %c0_24 = arith.constant 0 : index
      %62 = vector.load %arg5[%c0_23, %c0_24] : memref<8x128xf32, #tpu.memory_space<vmem>>, vector<8x128xf32>
      %63 = vector.shape_cast %61 : vector<8x1xf32> to vector<1x8x1xf32>
      %cst_25 = arith.constant dense<0.000000e+00> : vector<1xf32>
      %64 = vector.multi_reduction <add>, %63, %cst_25 [1, 2] : vector<1x8x1xf32> to vector<1xf32>
      %65 = vector.shape_cast %64 : vector<1xf32> to vector<1x1x1xf32>
      %66 = vector.extract %65[0, 0, 0] : f32 from vector<1x1x1xf32>
      %67 = vector.broadcast %66 : f32 to vector<8x128xf32>
      %68 = arith.addf %62, %67 : vector<8x128xf32>
      %c0_26 = arith.constant 0 : index
      %c0_27 = arith.constant 0 : index
      %69 = vector.load %arg5[%c0_26, %c0_27] : memref<8x128xf32, #tpu.memory_space<vmem>>, vector<8x128xf32>
      tpu.vector_store %arg5[%c0_26, %c0_27], %68 {strides = array<i32>} : memref<8x128xf32, #tpu.memory_space<vmem>>, vector<8x128xf32>,
    } else {
    }
    return
  }
  func.func @transform_0(%arg0: i32, %arg1: i32) -> (i32, i32) {
    %c1_i32 = arith.constant 1 : i32
    %0 = arith.muli %arg0, %c1_i32 : i32
    %1 = arith.addi %0, %arg1 : i32
    %c0_i32 = arith.constant 0 : i32
    %2 = arith.minsi %1, %c0_i32 : i32
    %c0_i32_0 = arith.constant 0 : i32
    %c0_i32_1 = arith.constant 0 : i32
    return %2, %c0_i32_0 : i32, i32
  }
  func.func @transform_1(%arg0: i32, %arg1: i32) -> (i32, i32) {
    %c1_i32 = arith.constant 1 : i32
    %0 = arith.muli %arg0, %c1_i32 : i32
    %1 = arith.addi %0, %arg1 : i32
    %c0_i32 = arith.constant 0 : i32
    %2 = arith.minsi %1, %c0_i32 : i32
    %c0_i32_0 = arith.constant 0 : i32
    %c0_i32_1 = arith.constant 0 : i32
    return %2, %c0_i32_0 : i32, i32
  }
  func.func @transform_2(%arg0: i32, %arg1: i32) -> (i32, i32) {
    %c1_i32 = arith.constant 1 : i32
    %0 = arith.muli %arg0, %c1_i32 : i32
    %1 = arith.addi %0, %arg1 : i32
    %c0_i32 = arith.constant 0 : i32
    %2 = arith.minsi %1, %c0_i32 : i32
    %c0_i32_0 = arith.constant 0 : i32
    %c0_i32_1 = arith.constant 0 : i32
    return %2, %c0_i32_0 : i32, i32
  }
  func.func @transform_3(%arg0: i32, %arg1: i32) -> (i32, i32) {
    %c0_i32 = arith.constant 0 : i32
    %c0_i32_0 = arith.constant 0 : i32
    return %arg0, %c0_i32 : i32, i32
  }
}

</mosaic_0001>

<llo_original>
// kernel: tpu_custom_call.1
$region0: #{tpu_custom_call.1}
  #allocation0 [shape = 'u32[]', space=smem, size = 0x4, offset = 0x4, fixed_abs, tag = 'smem constant byte address 0x4 - core index']
  #allocation1 [shape = 'u32[144,128]{1,0:T(1,128)}', space=vmem, size = 0x12000, scoped, tag = 'internal scratch']
  %s0 = inlined_call_operand.hbm [shape: f32[8,32], index: 0, kind: input, shape index: {}]
  %s1 = inlined_call_operand.hbm [shape: f32[8,32], index: 1, kind: input, shape index: {}]
  %s2 = inlined_call_operand.hbm [shape: f32[8,32], index: 2, kind: input, shape index: {}]
  %s3 = inlined_call_operand.hbm [shape: f32[8,128], index: 3, kind: output, shape index: {}]
  %s4 = sld [smem:[#allocation0]]
  $region46: #{tpu_custom_call.1} parent=0
    _
  %s6 = ssub.s32 1, %s4
  %s7 = scalar_select 0, %s6, %s4
  $region1: #{tpu_custom_call.1} parent=0
    #allocation2 [shape = 'u8[4096]{0}', space=vmem, size = 0x1000, scoped, tag = 'input window, operand 0, single buffered']
    #allocation3 [shape = 's32[1]{0}', space=sflag, size = 0x4, scoped, tag = 'scoped memory for tpu_custom_call.1']
    #allocation4 [shape = 's32[1]{0}', space=sflag, size = 0x4, scoped, tag = 'scoped memory for tpu_custom_call.1']
    #allocation5 [shape = 'u8[4096]{0}', space=vmem, size = 0x1000, scoped, tag = 'input window, operand 1, single buffered']
    #allocation6 [shape = 's32[1]{0}', space=sflag, size = 0x4, scoped, tag = 'scoped memory for tpu_custom_call.1']
    #allocation7 [shape = 'u8[4096]{0}', space=vmem, size = 0x1000, scoped, tag = 'input window, operand 2, single buffered']
    #allocation8 [shape = 'u8[4096]{0}', space=vmem, size = 0x1000, scoped, tag = 'output window, operand 0, single buffered']
    %8 = vsyncpa [#allocation3], 0
    %9 = vsyncpa [#allocation6], 0
    %10 = vsyncpa [#allocation4], 0
    // Predicated region
    $region2: #{tpu_custom_call.1} parent=1 // pred_check
      _
    $region3: #{tpu_custom_call.1} parent=1 // pred_check_branch
      %12 = sbr.rel (0) target = $region5
    $region4: #{tpu_custom_call.1} parent=1 // pred_region
      %s13 = sadd.s32 0, 0
      %p14 = scmp.lt.s32.totalorder %s13, 0
      %s15 = scalar_select %p14, %s13, 0
      %s17 = ssub.s32 128, 128
      %18 = vsyncadd [#allocation3], %s17
      %s19 = smul.addr %s15, 128
      %s20 = scalar_lea.hbm %s0, %s19
      %s22 = sshll.u32 [#allocation2], 4
      %s23 = int_to_ptr.vmem [resolvable:$true] %s22
      %25 = dma.hbm_to_vmem [thread:$0]  %s20, 128, %s23, [#allocation3]
    $region5: #{tpu_custom_call.1} parent=1 // pred_fallthru
      _
    // Predicated region
    $region6: #{tpu_custom_call.1} parent=1 // pred_check
      _
    $region7: #{tpu_custom_call.1} parent=1 // pred_check_branch
      %27 = sbr.rel (0) target = $region9
    $region8: #{tpu_custom_call.1} parent=1 // pred_region
      %s28 = sadd.s32 0, 0
      %p29 = scmp.lt.s32.totalorder %s28, 0
      %s30 = scalar_select %p29, %s28, 0
      %s32 = ssub.s32 128, 128
      %33 = vsyncadd [#allocation6], %s32
      %s34 = smul.addr %s30, 128
      %s35 = scalar_lea.hbm %s1, %s34
      %s37 = sshll.u32 [#allocation5], 4
      %s38 = int_to_ptr.vmem [resolvable:$true] %s37
      %40 = dma.hbm_to_vmem [thread:$0]  %s35, 128, %s38, [#allocation6]
    $region9: #{tpu_custom_call.1} parent=1 // pred_fallthru
      _
    // Predicated region
    $region10: #{tpu_custom_call.1} parent=1 // pred_check
      _
    $region11: #{tpu_custom_call.1} parent=1 // pred_check_branch
      %42 = sbr.rel (0) target = $region13
    $region12: #{tpu_custom_call.1} parent=1 // pred_region
      %s43 = sadd.s32 0, 0
      %p44 = scmp.lt.s32.totalorder %s43, 0
      %s45 = scalar_select %p44, %s43, 0
      %s47 = ssub.s32 128, 128
      %48 = vsyncadd [#allocation6], %s47
      %s49 = smul.addr %s45, 128
      %s50 = scalar_lea.hbm %s2, %s49
      %s52 = sshll.u32 [#allocation7], 4
      %s53 = int_to_ptr.vmem [resolvable:$true] %s52
      %55 = dma.hbm_to_vmem [thread:$0]  %s50, 128, %s53, [#allocation6]
    $region13: #{tpu_custom_call.1} parent=1 // pred_fallthru
      _
    // Predicated region
    $region14: #{tpu_custom_call.1} parent=1 // pred_check
      _
    $region15: #{tpu_custom_call.1} parent=1 // pred_check_branch
      %57 = sbr.rel (0) target = $region17
    $region16: #{tpu_custom_call.1} parent=1 // pred_region
      %58 = dma.done [#allocation3], 128
    $region17: #{tpu_custom_call.1} parent=1 // pred_fallthru
      _
    // Predicated region
    $region18: #{tpu_custom_call.1} parent=1 // pred_check
      _
    $region19: #{tpu_custom_call.1} parent=1 // pred_check_branch
      %60 = sbr.rel (0) target = $region21
    $region20: #{tpu_custom_call.1} parent=1 // pred_region
      %61 = dma.done [#allocation6], 128
    $region21: #{tpu_custom_call.1} parent=1 // pred_fallthru
      _
    // Predicated region
    $region22: #{tpu_custom_call.1} parent=1 // pred_check
      _
    $region23: #{tpu_custom_call.1} parent=1 // pred_check_branch
      %63 = sbr.rel (0) target = $region25
    $region24: #{tpu_custom_call.1} parent=1 // pred_region
      %64 = dma.done [#allocation6], 128
    $region25: #{tpu_custom_call.1} parent=1 // pred_fallthru
      _
    %s65 = sadd.s32 0, 0
    %p66 = scmp.lt.s32.totalorder %s65, 0
    %s67 = scalar_select %p66, %s65, 0
    %s68 = sadd.s32 0, 0
    %p69 = scmp.lt.s32.totalorder %s68, 0
    %s70 = scalar_select %p69, %s68, 0
    %s71 = sadd.s32 0, 0
    %p72 = scmp.lt.s32.totalorder %s71, 0
    %s73 = scalar_select %p72, %s71, 0
    %s74 = sadd.s32 0, 0
    %p75 = scmp.eq.s32.totalorder 0, 0
    // Predicated region
    $region26: #{tpu_custom_call.1} parent=1 // pred_check
      %p76 = pneg %p75
    $region27: #{tpu_custom_call.1} parent=1 // pred_check_branch
      %78 = sbr.rel (%p76) target = $region29
    $region28: #{tpu_custom_call.1} parent=1 // pred_region
      %79 = vst [vmem:[#allocation8] sm:$0xff] 0.0
    $region29: #{tpu_custom_call.1} parent=1 // pred_fallthru
      _
    %v80 = vld [vmem:[#allocation2] sm:$0xff]
    %v81 = vld [vmem:[#allocation5] sm:$0xff]
    %v82 = vld [vmem:[#allocation7] sm:$0xff]
    %v83 = vmul.f32 %v80, %v80
    %vm84 = vcmask 261120
    %v85 = vsel %vm84, %v83, 0.0
    %86 = vadd.xlane.f32.xlu0 %v85
    %v87 = vpop.xlane.xlu0 %86
    %v88 = vmax.f32 %v87, 1e-24
    %v89 = vmul.f32 %v81, %v81
    %v90 = vsel %vm84, %v89, 0.0
    %91 = vadd.xlane.f32.xlu0 %v90
    %v92 = vpop.xlane.xlu0 %91
    %v93 = vmax.f32 %v92, 1e-24
    %v94 = vmul.f32 %v82, %v82
    %v95 = vsel %vm84, %v94, 0.0
    %96 = vadd.xlane.f32.xlu0 %v95
    %v97 = vpop.xlane.xlu0 %96
    %v98 = vmax.f32 %v97, 1e-24
    %v99 = vmul.f32 %v80, %v81
    %v100 = vsel %vm84, %v99, 0.0
    %101 = vadd.xlane.f32.xlu0 %v100
    %v102 = vpop.xlane.xlu0 %101
    %v103 = vmul.f32 %v80, %v82
    %v104 = vsel %vm84, %v103, 0.0
    %105 = vadd.xlane.f32.xlu0 %v104
    %v106 = vpop.xlane.xlu0 %105
    %v107 = vmul.f32 %v88, %v93
    %v108 = vrsqrt.pop %v107
    %v109 = vmul.f32 %v102, %v108
    %v110 = vmul.f32 %v88, %v98
    %v111 = vrsqrt.pop %v110
    %v112 = vmul.f32 %v106, %v111
    %v113 = vsub.f32 %v112, %v109
    %v114 = vmul.f32 %v113, 14.285714
    %v115 = vmax.f32 %v114, 0.0
    %v116 = vand.u32 2147483647, %v114
    %v117 = vsub.f32 0.0, %v116
    %v118 = vmul.f32 %v117, 1.442695
    %v119 = vpow.pop %v118
    %v120 = vadd.f32 %v119, 1.0
    %v121 = vlog2.pop %v120
    %v122 = vmul.f32 %v121, 0.6931472
    %v123 = vmul.f32 -0.5, %v119
    %v124 = vadd.f32 %v123, 1.0
    %v125 = vmul.f32 %v124, %v119
    %v126 = vand.u32 2147483647, %v119
    %vm127 = vcmp.lt.f32.partialorder %v126, 0.0004427343
    %v128 = vsel %vm127, %v125, %v122
    %v129 = vadd.f32 %v115, %v128
    %s130 = sadd.s32 %s74, 1
    %s131 = smul.u32 %s130, 8
    %p132 = scmp.le.s32.totalorder %s131, 8
    // Predicated region
    $region30: #{tpu_custom_call.1} parent=1 // pred_check
      %p133 = pneg %p132
    $region31: #{tpu_custom_call.1} parent=1 // pred_check_branch
      %135 = sbr.rel (%p133) target = $region33
    $region32: #{tpu_custom_call.1} parent=1 // pred_region
      %v136 = vld [vmem:[#allocation8] sm:$0xff]
      %vm137 = vcmask 7168
      %v138 = vsel %vm137, %v129, 0.0
      %139 = vadd.xlane.f32.xlu0 %v138
      %v140 = vpop.xlane.xlu0 %139
      %v141 = vrot.slane %v140, 4
      %v142 = vadd.f32 %v140, %v141
      %v143 = vrot.slane %v142, 2
      %v144 = vadd.f32 %v142, %v143
      %v145 = vrot.slane %v144, 1
      %v146 = vadd.f32 %v144, %v145
      %s147 = vtos %v146
      %v148 = vstv %s147
      %v149 = vadd.f32 %v136, %v148
      %150 = vst [vmem:[#allocation8] sm:$0xff] %v149
    $region33: #{tpu_custom_call.1} parent=1 // pred_fallthru
      _
    %p151 = scmp.gt.s32.totalorder %s131, 8
    // Predicated region
    $region34: #{tpu_custom_call.1} parent=1 // pred_check
      %p152 = pneg %p151
    $region35: #{tpu_custom_call.1} parent=1 // pred_check_branch
      %154 = sbr.rel (%p152) target = $region37
    $region36: #{tpu_custom_call.1} parent=1 // pred_region
      %s155 = smul.u32 %s74, 8
      %v156 = vlaneseq
      %v157 = vshrl.u32 %v156, 7
      %v158 = vstv %s155
      %v159 = vadd.s32 %v158, %v157
      %vm160 = vcmp.lt.s32.totalorder %v159, 8
      %v161 = vsel %vm160, %v129, 0.0
      %v162 = vld [vmem:[#allocation8] sm:$0xff]
      %vm163 = vcmask 7168
      %v164 = vsel %vm163, %v161, 0.0
      %165 = vadd.xlane.f32.xlu0 %v164
      %v166 = vpop.xlane.xlu0 %165
      %v167 = vrot.slane %v166, 4
      %v168 = vadd.f32 %v166, %v167
      %v169 = vrot.slane %v168, 2
      %v170 = vadd.f32 %v168, %v169
      %v171 = vrot.slane %v170, 1
      %v172 = vadd.f32 %v170, %v171
      %s173 = vtos %v172
      %v174 = vstv %s173
      %v175 = vadd.f32 %v162, %v174
      %176 = vst [vmem:[#allocation8] sm:$0xff] %v175
    $region37: #{tpu_custom_call.1} parent=1 // pred_fallthru
      _
    // Predicated region
    $region38: #{tpu_custom_call.1} parent=1 // pred_check
      _
    $region39: #{tpu_custom_call.1} parent=1 // pred_check_branch
      %178 = sbr.rel (0) target = $region41
    $region40: #{tpu_custom_call.1} parent=1 // pred_region
      %s180 = ssub.s32 128, 128
      %181 = vsyncadd [#allocation4], %s180
      %s183 = sshll.u32 [#allocation8], 4
      %s184 = int_to_ptr.vmem [resolvable:$true] %s183
      %186 = dma.vmem_to_hbm [thread:$0]  %s184, 128, %s3, [#allocation4]
    $region41: #{tpu_custom_call.1} parent=1 // pred_fallthru
      _
    // Predicated region
    $region42: #{tpu_custom_call.1} parent=1 // pred_check
      _
    $region43: #{tpu_custom_call.1} parent=1 // pred_check_branch
      %188 = sbr.rel (0) target = $region45
    $region44: #{tpu_custom_call.1} parent=1 // pred_region
      %189 = dma.done [#allocation4], 128
    $region45: #{tpu_custom_call.1} parent=1 // pred_fallthru
      _
    %190 = vsyncpa [#allocation3], 1
    %191 = vsyncpa [#allocation6], 1
    %192 = vsyncpa [#allocation4], 1

</llo_original>
